<compile_context>
chip_gen: v6e
topology: v6e:2x2x1
jax: 0.10.0
libtpu: 0.0.40
codegen_flags: <defaults>
</compile_context>

<pallas_src>
import functools
import math

import numpy as np

import jax
import jax.numpy as jnp
from jax.experimental import pallas as pl
from jax.experimental.pallas import tpu as pltpu


def _pos_enc_kernel(x_ref, e_ref, o_ref):
    """x: (T, K) = [scalars | 1 | 0-pad]; e: (K, L) expansion matrix; o: (T, L).

    One small MXU matmul does the scalar->lane expansion, frequency scaling and
    phase add; the VPU only runs the sin polynomial on dense 128-lane vregs.
    """
    pre = jnp.dot(x_ref[...], e_ref[...], preferred_element_type=jnp.float32)
    o_ref[...] = jnp.sin(pre)


@functools.partial(jax.jit, static_argnames=("depth", "row_tile"))
def positional_encoding(coord_2d: jax.Array, depth: int, *, row_tile: int = 1024) -> jax.Array:
    """Pallas equivalent of PositionalEncoding(depth).forward(coord_2d)."""
    if depth < 1:
        raise ValueError("depth must be >= 1")
    shape = coord_2d.shape
    C = shape[-1]
    two_d = 2 * depth
    # Lane width of one output row: lcm(2*depth, 128) -> every output block
    # ends on a multiple of 128 lanes (unmasked, full-width stores).
    L = (two_d * 128) // math.gcd(two_d, 128)
    G = L // two_d                                   # scalars per output row
    K = ((G + 1 + 7) // 8) * 8                       # matmul K: scalars + ones + 0-pad

    v = coord_2d.reshape(-1).astype(jnp.float32)     # flat scalar stream (M,)
    M = v.shape[0]
    if M == 0:
        return jnp.zeros((*shape[:-1], C * two_d), jnp.float32)
    rows = (M + G - 1) // G                          # output rows needed

    # --- grid / tile selection -------------------------------------------
    grid = (rows + row_tile - 1) // row_tile
    if grid <= 1:
        # Only split for megacore (v7x) when each half is big enough (>=256
        # rows) to amortize the ~0.35us per-step overhead; on 1-TC parts the
        # absolute cost of this split is negligible at that size.
        grid = 2 if rows >= 512 else 1
    elif grid % 2:
        grid += 1                                    # even step count: 2-TC balance
    if grid == 1:
        tile = rows                                  # block == full array: no 8-row pad
    else:
        tile = (((rows + grid - 1) // grid) + 7) // 8 * 8
    rows_p = grid * tile                             # minimal padded row count

    # --- inputs ------------------------------------------------------------
    pad = rows_p * G - M
    if pad:
        v = jnp.pad(v, (0, pad))                     # zero tail, sliced off below
    x = v.reshape(rows_p, G)                         # free row-major reshape
    cols = [x, jnp.ones((rows_p, 1), jnp.float32)]
    if K - G - 1 > 0:
        cols.append(jnp.zeros((rows_p, K - G - 1), jnp.float32))
    x_aug = jnp.concatenate(cols, axis=1)            # (rows_p, K), tiny vs output

    # Expansion matrix E (trace-time constant, f32 exact match to torch freqs).
    freq = (2.0 ** np.arange(depth, dtype=np.float32)) * np.float32(np.pi)
    period = np.concatenate([freq, freq])            # (2D,) [sin freqs | cos freqs]
    phase = np.concatenate([np.zeros(depth, np.float32),
                            np.full(depth, np.float32(np.pi / 2), np.float32)])
    e = np.zeros((K, L), np.float32)
    for g in range(G):
        e[g, g * two_d:(g + 1) * two_d] = period     # scalar g scales its 2D lanes
    e[G, :] = np.tile(phase, G)                      # ones column adds the phase

    # --- pallas_call --------------------------------------------------------
    in_block_bytes = tile * 128 * 4                  # (tile, K) lane-padded to 128
    out_block_bytes = tile * L * 4
    vmem_limit = min(max(3 * (in_block_bytes + out_block_bytes) + (2 << 20),
                         8 << 20), 32 << 20)

    out = pl.pallas_call(
        _pos_enc_kernel,
        out_shape=jax.ShapeDtypeStruct((rows_p, L), jnp.float32),
        grid=(grid,),
        in_specs=[
            pl.BlockSpec((tile, K), lambda i: (i, 0)),
            pl.BlockSpec((K, L), lambda i: (0, 0)),  # constant block, fetched once
        ],
        out_specs=pl.BlockSpec((tile, L), lambda i: (i, 0)),
        compiler_params=pltpu.CompilerParams(
            dimension_semantics=("parallel",),
            vmem_limit_bytes=vmem_limit,
        ),
    )(x_aug, jnp.asarray(e))

    # Flat ordering of `out` equals the PyTorch stack+view ordering exactly.
    out_flat = out.reshape(-1)
    if pad:
        out_flat = out_flat[: M * two_d]             # ragged case: one extra copy
    return out_flat.reshape(*shape[:-1], C * two_d)


def _reference(coord_2d: jax.Array, depth: int) -> jax.Array:
    # Pure-JAX reference mirroring the PyTorch module exactly.
    shape = coord_2d.shape
    freq = (2.0 ** jnp.arange(depth, dtype=jnp.float32)) * jnp.pi
    spectrum = coord_2d[..., None].astype(jnp.float32) * freq
    enc = jnp.stack([jnp.sin(spectrum), jnp.cos(spectrum)], axis=-2)
    return enc.reshape(*shape[:-1], -1)


if __name__ == "__main__":
    key = jax.random.PRNGKey(0)
    depth = 8

    # Main case: batch=2, 8x8 spatial positions, 2 coordinate channels.
    coord = jax.random.uniform(key, (2, 8, 8, 2), dtype=jnp.float32)
    out = jax.block_until_ready(positional_encoding(coord, depth=depth))
    ref = _reference(coord, depth)
    assert out.shape == ref.shape == (2, 8, 8, 2 * 2 * depth), out.shape
    assert jnp.allclose(out, ref, atol=5e-4, rtol=5e-4), (
        float(jnp.max(jnp.abs(out - ref))))

    # Ragged case: exercises the minimal-padding / tail-slice path.
    key2 = jax.random.split(key)[0]
    coord2 = jax.random.uniform(key2, (3, 5, 2), dtype=jnp.float32)
    out2 = jax.block_until_ready(positional_encoding(coord2, depth=depth))
    ref2 = _reference(coord2, depth)
    assert out2.shape == ref2.shape == (3, 5, 2 * 2 * depth), out2.shape
    assert jnp.allclose(out2, ref2, atol=5e-4, rtol=5e-4), (
        float(jnp.max(jnp.abs(out2 - ref2))))

    print("KERNEL_OK")
</pallas_src>

<mosaic_0001>
module attributes {stable_mosaic.version = 11 : i64} {
  func.func @_pos_enc_kernel(%arg0: i32, %arg1: memref<32x16xf32, #tpu.memory_space<vmem>>, %arg2: memref<16x128xf32, #tpu.memory_space<vmem>>, %arg3: memref<32x128xf32, #tpu.memory_space<vmem>>) attributes {dimension_semantics = [#tpu.dimension_semantics<parallel>], iteration_bounds = array<i64: 1>, scalar_prefetch = 0 : i64, scratch_operands = 0 : i64, tpu.core_type = #tpu.core_type<tc>, window_params = [{transform_indices = @transform_0, window_bounds = array<i64: 32, 16>}, {pipeline_mode = #tpu.pipeline_mode<synchronous>, transform_indices = @transform_1, window_bounds = array<i64: 16, 128>}, {transform_indices = @transform_2, window_bounds = array<i64: 32, 128>}]} {
    %c0 = arith.constant 0 : index
    %c0_0 = arith.constant 0 : index
    %0 = vector.load %arg1[%c0, %c0_0] : memref<32x16xf32, #tpu.memory_space<vmem>>, vector<32x16xf32>
    %c0_1 = arith.constant 0 : index
    %c0_2 = arith.constant 0 : index
    %1 = vector.load %arg2[%c0_1, %c0_2] : memref<16x128xf32, #tpu.memory_space<vmem>>, vector<16x128xf32>
    %cst = arith.constant dense<0.000000e+00> : vector<32x128xf32>
    %2 = tpu.matmul %0, %1, %cst {dimension_numbers = #tpu.dot_dimension_numbers<[1], [0], [0], [1], [0, 0, 1, 1], [], []>} : vector<32x16xf32>, vector<16x128xf32>, vector<32x128xf32> -> vector<32x128xf32>
    %3 = math.sin %2 : vector<32x128xf32>
    %c0_3 = arith.constant 0 : index
    %c0_4 = arith.constant 0 : index
    %4 = vector.load %arg3[%c0_3, %c0_4] : memref<32x128xf32, #tpu.memory_space<vmem>>, vector<32x128xf32>
    tpu.vector_store %arg3[%c0_3, %c0_4], %3 {strides = array<i32>} : memref<32x128xf32, #tpu.memory_space<vmem>>, vector<32x128xf32>,
    return
  }
  func.func @transform_0(%arg0: i32) -> (i32, i32) {
    %c0_i32 = arith.constant 0 : i32
    %c0_i32_0 = arith.constant 0 : i32
    return %arg0, %c0_i32 : i32, i32
  }
  func.func @transform_1(%arg0: i32) -> (i32, i32) {
    %c0_i32 = arith.constant 0 : i32
    %c0_i32_0 = arith.constant 0 : i32
    %c0_i32_1 = arith.constant 0 : i32
    return %c0_i32, %c0_i32_0 : i32, i32
  }
  func.func @transform_2(%arg0: i32) -> (i32, i32) {
    %c0_i32 = arith.constant 0 : i32
    %c0_i32_0 = arith.constant 0 : i32
    return %arg0, %c0_i32 : i32, i32
  }
}

</mosaic_0001>

<llo_original>
// kernel: positional_encoding.1
$region0: #{positional_encoding.1}
  #allocation0 [shape = 'u32[]', space=smem, size = 0x4, offset = 0x4, fixed_abs, tag = 'smem constant byte address 0x4 - core index']
  #allocation1 [shape = 'u32[144,128]{1,0:T(1,128)}', space=vmem, size = 0x12000, scoped, tag = 'internal scratch']
  %s0 = inlined_call_operand.vmem [shape: f32[32,16], index: 0, kind: input, shape index: {}]
  %s1 = inlined_call_operand.vmem [shape: f32[16,128], index: 1, kind: input, shape index: {}]
  %s2 = inlined_call_operand.vmem [shape: f32[32,128], index: 2, kind: output, shape index: {}]
  %s3 = sld [smem:[#allocation0]]
  $region18: #{positional_encoding.1} parent=0
    _
  %s5 = ssub.s32 1, %s3
  %s6 = scalar_select 0, %s5, %s3
  // Predicated region
  $region2: #{positional_encoding.1} parent=0 // pred_check
    _
  $region3: #{positional_encoding.1} parent=0 // pred_check_branch
    %8 = sbr.rel (0) target = $region5
  $region4: #{positional_encoding.1} parent=0 // pred_region
    _
  $region5: #{positional_encoding.1} parent=0 // pred_fallthru
    _
  // Predicated region
  $region6: #{positional_encoding.1} parent=0 // pred_check
    _
  $region7: #{positional_encoding.1} parent=0 // pred_check_branch
    %10 = sbr.rel (0) target = $region9
  $region8: #{positional_encoding.1} parent=0 // pred_region
    _
  $region9: #{positional_encoding.1} parent=0 // pred_fallthru
    _
  %v11 = vld [vmem:[%s0] sm:$0xff]
  %v12 = vld [vmem:[%s0 + $0x8] sm:$0xff]
  %v13 = vld [vmem:[%s0 + $0x10] sm:$0xff]
  %v14 = vld [vmem:[%s0 + $0x18] sm:$0xff]
  %v15 = vld [vmem:[%s1] sm:$0xff]
  %v16 = vld [vmem:[%s1 + $0x8] sm:$0xff]
  %vm17 = vcmask 130048
  %v19 = vsel %vm17, %v11, 0
  %v22 = vsel %vm17, %v12, 0
  %v25 = vsel %vm17, %v13, 0
  %v28 = vsel %vm17, %v14, 0
  %30 = vmatprep.subr.mxu0 0.0
  %31 = vmatpush1.msra.mxu0 0.0
  %32 = vmatprep.subr.mxu0 0.0
  %33 = vmatpush1.msra.mxu0 0.0
  %34 = vmatprep.subr.mxu0 0.0
  %35 = vmatpush1.msra.mxu0 0.0
  %36 = vmatprep.subr.mxu0 0.0
  %37 = vmatpush1.msra.mxu0 0.0
  %38 = vmatprep.subr.mxu0 0.0
  %39 = vmatpush1.msra.mxu0 0.0
  %40 = vmatprep.subr.mxu0 0.0
  %41 = vmatpush1.msra.mxu0 0.0
  %42 = vmatprep.subr.mxu0 0.0
  %43 = vmatpush1.msra.mxu0 0.0
  %44 = vmatprep.subr.mxu0 0.0
  %45 = vmatpush1.msra.mxu0 0.0
  %46 = vmatprep.subr.mxu0 0.0
  %47 = vmatpush1.msra.mxu0 0.0
  %48 = vmatprep.subr.mxu0 0.0
  %49 = vmatpush1.msra.mxu0 0.0
  %50 = vmatprep.subr.mxu0 0.0
  %51 = vmatpush1.msra.mxu0 0.0
  %52 = vmatprep.subr.mxu0 0.0
  %53 = vmatpush1.msra.mxu0 0.0
  %54 = vmatprep.subr.mxu0 0.0
  %55 = vmatpush1.msra.mxu0 0.0
  %56 = vmatprep.subr.mxu0 0.0
  %57 = vmatpush1.msra.mxu0 0.0
  %58 = vmatprep.subr.mxu0 0.0
  %59 = vmatpush1.msra.mxu0 %v16
  %60 = vmatprep.subr.mxu0 0.0
  %61 = vmatpush1.msra.mxu0 %v15
  %62 = vmatprep.subr.mxu0 0.0
  %63 = vmatpush2.msra.mxu0 0.0
  %64 = vmatprep.subr.mxu0 0.0
  %65 = vmatpush2.msra.mxu0 0.0
  %66 = vmatprep.subr.mxu0 0.0
  %67 = vmatpush2.msra.mxu0 0.0
  %68 = vmatprep.subr.mxu0 0.0
  %69 = vmatpush2.msra.mxu0 0.0
  %70 = vmatprep.subr.mxu0 0.0
  %71 = vmatpush2.msra.mxu0 0.0
  %72 = vmatprep.subr.mxu0 0.0
  %73 = vmatpush2.msra.mxu0 0.0
  %74 = vmatprep.subr.mxu0 0.0
  %75 = vmatpush2.msra.mxu0 0.0
  %76 = vmatprep.subr.mxu0 0.0
  %77 = vmatpush2.msra.mxu0 0.0
  %78 = vmatprep.subr.mxu0 0.0
  %79 = vmatpush2.msra.mxu0 0.0
  %80 = vmatprep.subr.mxu0 0.0
  %81 = vmatpush2.msra.mxu0 0.0
  %82 = vmatprep.subr.mxu0 0.0
  %83 = vmatpush2.msra.mxu0 0.0
  %84 = vmatprep.subr.mxu0 0.0
  %85 = vmatpush2.msra.mxu0 0.0
  %86 = vmatprep.subr.mxu0 0.0
  %87 = vmatpush2.msra.mxu0 0.0
  %88 = vmatprep.subr.mxu0 0.0
  %89 = vmatpush2.msra.mxu0 0.0
  %90 = vmatprep.subr.mxu0 0.0
  %91 = vmatpush2.msra.mxu0 0.0
  %92 = vmatprep.subr.mxu0 0.0
  %93 = vmatpush2.msra.mxu0 0.0
  %94 = vmatprep.mubr.f32.mxu0 0.0
  %95 = vmatmul.mubr.f32.gmra.mxu0 %v19
  %v96 = vpop.f32.mrf.mxu0
  %v97 = vadd.f32 0.0, %v96
  %v98 = vpop.f32.mrf.mxu0
  %99 = vmatprep.mubr.f32.mxu0 0.0
  %100 = vmatmul.mubr.f32.gmra.mxu0 %v22
  %v101 = vpop.f32.mrf.mxu0
  %v102 = vadd.f32 0.0, %v101
  %v103 = vpop.f32.mrf.mxu0
  %104 = vmatprep.mubr.f32.mxu0 0.0
  %105 = vmatmul.mubr.f32.gmra.mxu0 %v25
  %v106 = vpop.f32.mrf.mxu0
  %v107 = vadd.f32 0.0, %v106
  %v108 = vpop.f32.mrf.mxu0
  %109 = vmatprep.mubr.f32.mxu0 0.0
  %110 = vmatmul.mubr.f32.gmra.mxu0 %v28
  %v111 = vpop.f32.mrf.mxu0
  %v112 = vadd.f32 0.0, %v111
  %v113 = vpop.f32.mrf.mxu0
  %114 = vdwg.mxu0
  %v115 = vand.u32 2147483647, %v97
  %vm116 = vcmp.le.f32.partialorder %v115, 0.7853982
  %vm117 = vcmp.lt.s32.totalorder %v97, 0
  %v118 = vand.u32 %v97, 2139095040
  %v119 = vshrl.u32 %v118, 23
  %v120 = vsub.s32 %v119, 127
  %v121 = vand.u32 2147483647, %v97
  %v122 = vand.u32 %v121, 8388607
  %v123 = vor.u32 %v122, 8388608
  %v124 = vsub.s32 0, %v123
  %v125 = vadd.s32 %v120, 1
  %vm126 = vcmp.gt.s32.totalorder %v125, 0
  %v127 = vsel %vm126, %v125, 0
  %v128 = vshrl.u32 %v127, 5
  %v129 = vand.u32 %v127, 31
  %v130 = vsub.s32 32, %v129
  %v131 = vshrl.u32 683565275, %v130
  %v132 = vshll.u32 683565275, %v129
  %v133 = vshrl.u32 2475754826, %v130
  %v134 = vor.u32 %v132, %v133
  %v135 = vshll.u32 2475754826, %v129
  %v136 = vshrl.u32 2131351028, %v130
  %v137 = vor.u32 %v135, %v136
  %v138 = vshll.u32 2131351028, %v129
  %v139 = vshrl.u32 2102212464, %v130
  %v140 = vor.u32 %v138, %v139
  %v141 = vshll.u32 2102212464, %v129
  %v142 = vshrl.u32 920167782, %v130
  %v143 = vor.u32 %v141, %v142
  %v144 = vshll.u32 920167782, %v129
  %v145 = vshrl.u32 1326507024, %v130
  %v146 = vor.u32 %v144, %v145
  %vm147 = vcmp.lt.s32.totalorder %v128, 1
  %vm148 = vcmp.lt.s32.totalorder %v128, 2
  %vm149 = vcmp.lt.s32.totalorder %v128, 3
  %vm150 = vcmp.lt.s32.totalorder %v128, 4
  %v151 = vsel %vm147, %v131, %v134
  %v152 = vsel %vm150, %v140, 2102212464
  %v153 = vsel %vm149, %v137, %v152
  %v154 = vsel %vm148, %v151, %v153
  %v155 = vsel %vm147, %v134, %v137
  %v156 = vsel %vm150, %v143, 920167782
  %v157 = vsel %vm149, %v140, %v156
  %v158 = vsel %vm148, %v155, %v157
  %v159 = vsel %vm147, %v137, %v140
  %v160 = vsel %vm150, %v146, 1326507024
  %v161 = vsel %vm149, %v143, %v160
  %v162 = vsel %vm148, %v159, %v161
  %v163 = vshll.u32 %v123, 8
  %v164 = vmul.u32.u64.compose %v163, %v162
  %v165 = vextract.low.u32 %v164
  %v166 = vextract.high.u32 %v164
  %v167 = vmul.u32.u64.compose %v163, %v158
  %v168 = vextract.low.u32 %v167
  %v169 = vextract.high.u32 %v167
  %v170 = vmul.u32 %v163, %v154
  %v171 = vadd.s32 %v166, %v168
  %vm172 = vc.u32 %v166, %v168
  %v173 = vadd.s32 %v169, 1
  %v174 = vsel %vm172, %v173, %v169
  %v175 = vadd.s32 %v170, %v174
  %v176 = vadd.s32 %v175, 536870912
  %v177 = vshrl.u32 %v176, 30
  %v178 = vshll.u32 %v177, 30
  %v179 = vsub.s32 %v175, %v178
  %vm180 = vcmp.lt.s32.totalorder %v179, 0
  %v181 = vsub.s32 0, %v179
  %v182 = vsel %vm180, %v181, %v179
  %v183 = vclz %v182
  %v184 = vsub.s32 %v183, 2
  %vm185 = vcmp.gt.s32.totalorder 0, %v184
  %v186 = vsel %vm185, 0, %v184
  %v187 = vsub.s32 32, %v186
  %v188 = vshll.u32 %v179, %v186
  %v189 = vshrl.u32 %v171, %v187
  %v190 = vor.u32 %v188, %v189
  %v191 = vsub.s32 4294967266, %v186
  %v192 = vadd.s32 %v191, 127
  %v193 = vshll.u32 %v192, 23
  %v194 = vor.u32 4788187, %v193
  %v195 = vand.u32 2147483647, %v194
  %v197 = vcvt.s32.f32 %v190
  %v198 = vmul.f32 %v197, %v195
  %v199 = vxor.u32 %v198, 2147483648
  %v200 = vsel %vm117, %v199, %v198
  %v201 = vsub.s32 4, %v177
  %v202 = vsel %vm117, %v201, %v177
  %v203 = vsel %vm116, %v97, %v200
  %v204 = vsel %vm116, 0, %v202
  %v205 = vcosq.f32.pop %v203
  %v206 = vsinq.f32.pop %v203
  %vm207 = vweird.f32 %v97
  %v208 = vadd.s32 %v204, 3
  %v209 = vand.u32 %v208, 3
  %vm210 = vcmp.lt.s32.totalorder %v209, 2
  %vm211 = vcmp.eq.s32.totalorder %v209, 0
  %v212 = vxor.u32 %v206, 2147483648
  %v213 = vsel %vm211, %v205, %v212
  %vm214 = vcmp.eq.s32.totalorder %v209, 2
  %v215 = vxor.u32 %v205, 2147483648
  %v216 = vsel %vm214, %v215, %v206
  %v217 = vsel %vm210, %v213, %v216
  %v218 = vsel %vm207, nan, %v217
  %v219 = vand.u32 2147483647, %v102
  %vm220 = vcmp.le.f32.partialorder %v219, 0.7853982
  %vm221 = vcmp.lt.s32.totalorder %v102, 0
  %v222 = vand.u32 %v102, 2139095040
  %v223 = vshrl.u32 %v222, 23
  %v224 = vsub.s32 %v223, 127
  %v225 = vand.u32 2147483647, %v102
  %v226 = vand.u32 %v225, 8388607
  %v227 = vor.u32 %v226, 8388608
  %v228 = vsub.s32 0, %v227
  %v229 = vadd.s32 %v224, 1
  %vm230 = vcmp.gt.s32.totalorder %v229, 0
  %v231 = vsel %vm230, %v229, 0
  %v232 = vshrl.u32 %v231, 5
  %v233 = vand.u32 %v231, 31
  %v234 = vsub.s32 32, %v233
  %v235 = vshrl.u32 683565275, %v234
  %v236 = vshll.u32 683565275, %v233
  %v237 = vshrl.u32 2475754826, %v234
  %v238 = vor.u32 %v236, %v237
  %v239 = vshll.u32 2475754826, %v233
  %v240 = vshrl.u32 2131351028, %v234
  %v241 = vor.u32 %v239, %v240
  %v242 = vshll.u32 2131351028, %v233
  %v243 = vshrl.u32 2102212464, %v234
  %v244 = vor.u32 %v242, %v243
  %v245 = vshll.u32 2102212464, %v233
  %v246 = vshrl.u32 920167782, %v234
  %v247 = vor.u32 %v245, %v246
  %v248 = vshll.u32 920167782, %v233
  %v249 = vshrl.u32 1326507024, %v234
  %v250 = vor.u32 %v248, %v249
  %vm251 = vcmp.lt.s32.totalorder %v232, 1
  %vm252 = vcmp.lt.s32.totalorder %v232, 2
  %vm253 = vcmp.lt.s32.totalorder %v232, 3
  %vm254 = vcmp.lt.s32.totalorder %v232, 4
  %v255 = vsel %vm251, %v235, %v238
  %v256 = vsel %vm254, %v244, 2102212464
  %v257 = vsel %vm253, %v241, %v256
  %v258 = vsel %vm252, %v255, %v257
  %v259 = vsel %vm251, %v238, %v241
  %v260 = vsel %vm254, %v247, 920167782
  %v261 = vsel %vm253, %v244, %v260
  %v262 = vsel %vm252, %v259, %v261
  %v263 = vsel %vm251, %v241, %v244
  %v264 = vsel %vm254, %v250, 1326507024
  %v265 = vsel %vm253, %v247, %v264
  %v266 = vsel %vm252, %v263, %v265
  %v267 = vshll.u32 %v227, 8
  %v268 = vmul.u32.u64.compose %v267, %v266
  %v269 = vextract.low.u32 %v268
  %v270 = vextract.high.u32 %v268
  %v271 = vmul.u32.u64.compose %v267, %v262
  %v272 = vextract.low.u32 %v271
  %v273 = vextract.high.u32 %v271
  %v274 = vmul.u32 %v267, %v258
  %v275 = vadd.s32 %v270, %v272
  %vm276 = vc.u32 %v270, %v272
  %v277 = vadd.s32 %v273, 1
  %v278 = vsel %vm276, %v277, %v273
  %v279 = vadd.s32 %v274, %v278
  %v280 = vadd.s32 %v279, 536870912
  %v281 = vshrl.u32 %v280, 30
  %v282 = vshll.u32 %v281, 30
  %v283 = vsub.s32 %v279, %v282
  %vm284 = vcmp.lt.s32.totalorder %v283, 0
  %v285 = vsub.s32 0, %v283
  %v286 = vsel %vm284, %v285, %v283
  %v287 = vclz %v286
  %v288 = vsub.s32 %v287, 2
  %vm289 = vcmp.gt.s32.totalorder 0, %v288
  %v290 = vsel %vm289, 0, %v288
  %v291 = vsub.s32 32, %v290
  %v292 = vshll.u32 %v283, %v290
  %v293 = vshrl.u32 %v275, %v291
  %v294 = vor.u32 %v292, %v293
  %v295 = vsub.s32 4294967266, %v290
  %v296 = vadd.s32 %v295, 127
  %v297 = vshll.u32 %v296, 23
  %v298 = vor.u32 4788187, %v297
  %v299 = vand.u32 2147483647, %v298
  %v301 = vcvt.s32.f32 %v294
  %v302 = vmul.f32 %v301, %v299
  %v303 = vxor.u32 %v302, 2147483648
  %v304 = vsel %vm221, %v303, %v302
  %v305 = vsub.s32 4, %v281
  %v306 = vsel %vm221, %v305, %v281
  %v307 = vsel %vm220, %v102, %v304
  %v308 = vsel %vm220, 0, %v306
  %v309 = vcosq.f32.pop %v307
  %v310 = vsinq.f32.pop %v307
  %vm311 = vweird.f32 %v102
  %v312 = vadd.s32 %v308, 3
  %v313 = vand.u32 %v312, 3
  %vm314 = vcmp.lt.s32.totalorder %v313, 2
  %vm315 = vcmp.eq.s32.totalorder %v313, 0
  %v316 = vxor.u32 %v310, 2147483648
  %v317 = vsel %vm315, %v309, %v316
  %vm318 = vcmp.eq.s32.totalorder %v313, 2
  %v319 = vxor.u32 %v309, 2147483648
  %v320 = vsel %vm318, %v319, %v310
  %v321 = vsel %vm314, %v317, %v320
  %v322 = vsel %vm311, nan, %v321
  %v323 = vand.u32 2147483647, %v107
  %vm324 = vcmp.le.f32.partialorder %v323, 0.7853982
  %vm325 = vcmp.lt.s32.totalorder %v107, 0
  %v326 = vand.u32 %v107, 2139095040
  %v327 = vshrl.u32 %v326, 23
  %v328 = vsub.s32 %v327, 127
  %v329 = vand.u32 2147483647, %v107
  %v330 = vand.u32 %v329, 8388607
  %v331 = vor.u32 %v330, 8388608
  %v332 = vsub.s32 0, %v331
  %v333 = vadd.s32 %v328, 1
  %vm334 = vcmp.gt.s32.totalorder %v333, 0
  %v335 = vsel %vm334, %v333, 0
  %v336 = vshrl.u32 %v335, 5
  %v337 = vand.u32 %v335, 31
  %v338 = vsub.s32 32, %v337
  %v339 = vshrl.u32 683565275, %v338
  %v340 = vshll.u32 683565275, %v337
  %v341 = vshrl.u32 2475754826, %v338
  %v342 = vor.u32 %v340, %v341
  %v343 = vshll.u32 2475754826, %v337
  %v344 = vshrl.u32 2131351028, %v338
  %v345 = vor.u32 %v343, %v344
  %v346 = vshll.u32 2131351028, %v337
  %v347 = vshrl.u32 2102212464, %v338
  %v348 = vor.u32 %v346, %v347
  %v349 = vshll.u32 2102212464, %v337
  %v350 = vshrl.u32 920167782, %v338
  %v351 = vor.u32 %v349, %v350
  %v352 = vshll.u32 920167782, %v337
  %v353 = vshrl.u32 1326507024, %v338
  %v354 = vor.u32 %v352, %v353
  %vm355 = vcmp.lt.s32.totalorder %v336, 1
  %vm356 = vcmp.lt.s32.totalorder %v336, 2
  %vm357 = vcmp.lt.s32.totalorder %v336, 3
  %vm358 = vcmp.lt.s32.totalorder %v336, 4
  %v359 = vsel %vm355, %v339, %v342
  %v360 = vsel %vm358, %v348, 2102212464
  %v361 = vsel %vm357, %v345, %v360
  %v362 = vsel %vm356, %v359, %v361
  %v363 = vsel %vm355, %v342, %v345
  %v364 = vsel %vm358, %v351, 920167782
  %v365 = vsel %vm357, %v348, %v364
  %v366 = vsel %vm356, %v363, %v365
  %v367 = vsel %vm355, %v345, %v348
  %v368 = vsel %vm358, %v354, 1326507024
  %v369 = vsel %vm357, %v351, %v368
  %v370 = vsel %vm356, %v367, %v369
  %v371 = vshll.u32 %v331, 8
  %v372 = vmul.u32.u64.compose %v371, %v370
  %v373 = vextract.low.u32 %v372
  %v374 = vextract.high.u32 %v372
  %v375 = vmul.u32.u64.compose %v371, %v366
  %v376 = vextract.low.u32 %v375
  %v377 = vextract.high.u32 %v375
  %v378 = vmul.u32 %v371, %v362
  %v379 = vadd.s32 %v374, %v376
  %vm380 = vc.u32 %v374, %v376
  %v381 = vadd.s32 %v377, 1
  %v382 = vsel %vm380, %v381, %v377
  %v383 = vadd.s32 %v378, %v382
  %v384 = vadd.s32 %v383, 536870912
  %v385 = vshrl.u32 %v384, 30
  %v386 = vshll.u32 %v385, 30
  %v387 = vsub.s32 %v383, %v386
  %vm388 = vcmp.lt.s32.totalorder %v387, 0
  %v389 = vsub.s32 0, %v387
  %v390 = vsel %vm388, %v389, %v387
  %v391 = vclz %v390
  %v392 = vsub.s32 %v391, 2
  %vm393 = vcmp.gt.s32.totalorder 0, %v392
  %v394 = vsel %vm393, 0, %v392
  %v395 = vsub.s32 32, %v394
  %v396 = vshll.u32 %v387, %v394
  %v397 = vshrl.u32 %v379, %v395
  %v398 = vor.u32 %v396, %v397
  %v399 = vsub.s32 4294967266, %v394
  %v400 = vadd.s32 %v399, 127
  %v401 = vshll.u32 %v400, 23
  %v402 = vor.u32 4788187, %v401
  %v403 = vand.u32 2147483647, %v402
  %v405 = vcvt.s32.f32 %v398
  %v406 = vmul.f32 %v405, %v403
  %v407 = vxor.u32 %v406, 2147483648
  %v408 = vsel %vm325, %v407, %v406
  %v409 = vsub.s32 4, %v385
  %v410 = vsel %vm325, %v409, %v385
  %v411 = vsel %vm324, %v107, %v408
  %v412 = vsel %vm324, 0, %v410
  %v413 = vcosq.f32.pop %v411
  %v414 = vsinq.f32.pop %v411
  %vm415 = vweird.f32 %v107
  %v416 = vadd.s32 %v412, 3
  %v417 = vand.u32 %v416, 3
  %vm418 = vcmp.lt.s32.totalorder %v417, 2
  %vm419 = vcmp.eq.s32.totalorder %v417, 0
  %v420 = vxor.u32 %v414, 2147483648
  %v421 = vsel %vm419, %v413, %v420
  %vm422 = vcmp.eq.s32.totalorder %v417, 2
  %v423 = vxor.u32 %v413, 2147483648
  %v424 = vsel %vm422, %v423, %v414
  %v425 = vsel %vm418, %v421, %v424
  %v426 = vsel %vm415, nan, %v425
  %v427 = vand.u32 2147483647, %v112
  %vm428 = vcmp.le.f32.partialorder %v427, 0.7853982
  %vm429 = vcmp.lt.s32.totalorder %v112, 0
  %v430 = vand.u32 %v112, 2139095040
  %v431 = vshrl.u32 %v430, 23
  %v432 = vsub.s32 %v431, 127
  %v433 = vand.u32 2147483647, %v112
  %v434 = vand.u32 %v433, 8388607
  %v435 = vor.u32 %v434, 8388608
  %v436 = vsub.s32 0, %v435
  %v437 = vadd.s32 %v432, 1
  %vm438 = vcmp.gt.s32.totalorder %v437, 0
  %v439 = vsel %vm438, %v437, 0
  %v440 = vshrl.u32 %v439, 5
  %v441 = vand.u32 %v439, 31
  %v442 = vsub.s32 32, %v441
  %v443 = vshrl.u32 683565275, %v442
  %v444 = vshll.u32 683565275, %v441
  %v445 = vshrl.u32 2475754826, %v442
  %v446 = vor.u32 %v444, %v445
  %v447 = vshll.u32 2475754826, %v441
  %v448 = vshrl.u32 2131351028, %v442
  %v449 = vor.u32 %v447, %v448
  %v450 = vshll.u32 2131351028, %v441
  %v451 = vshrl.u32 2102212464, %v442
  %v452 = vor.u32 %v450, %v451
  %v453 = vshll.u32 2102212464, %v441
  %v454 = vshrl.u32 920167782, %v442
  %v455 = vor.u32 %v453, %v454
  %v456 = vshll.u32 920167782, %v441
  %v457 = vshrl.u32 1326507024, %v442
  %v458 = vor.u32 %v456, %v457
  %vm459 = vcmp.lt.s32.totalorder %v440, 1
  %vm460 = vcmp.lt.s32.totalorder %v440, 2
  %vm461 = vcmp.lt.s32.totalorder %v440, 3
  %vm462 = vcmp.lt.s32.totalorder %v440, 4
  %v463 = vsel %vm459, %v443, %v446
  %v464 = vsel %vm462, %v452, 2102212464
  %v465 = vsel %vm461, %v449, %v464
  %v466 = vsel %vm460, %v463, %v465
  %v467 = vsel %vm459, %v446, %v449
  %v468 = vsel %vm462, %v455, 920167782
  %v469 = vsel %vm461, %v452, %v468
  %v470 = vsel %vm460, %v467, %v469
  %v471 = vsel %vm459, %v449, %v452
  %v472 = vsel %vm462, %v458, 1326507024
  %v473 = vsel %vm461, %v455, %v472
  %v474 = vsel %vm460, %v471, %v473
  %v475 = vshll.u32 %v435, 8
  %v476 = vmul.u32.u64.compose %v475, %v474
  %v477 = vextract.low.u32 %v476
  %v478 = vextract.high.u32 %v476
  %v479 = vmul.u32.u64.compose %v475, %v470
  %v480 = vextract.low.u32 %v479
  %v481 = vextract.high.u32 %v479
  %v482 = vmul.u32 %v475, %v466
  %v483 = vadd.s32 %v478, %v480
  %vm484 = vc.u32 %v478, %v480
  %v485 = vadd.s32 %v481, 1
  %v486 = vsel %vm484, %v485, %v481
  %v487 = vadd.s32 %v482, %v486
  %v488 = vadd.s32 %v487, 536870912
  %v489 = vshrl.u32 %v488, 30
  %v490 = vshll.u32 %v489, 30
  %v491 = vsub.s32 %v487, %v490
  %vm492 = vcmp.lt.s32.totalorder %v491, 0
  %v493 = vsub.s32 0, %v491
  %v494 = vsel %vm492, %v493, %v491
  %v495 = vclz %v494
  %v496 = vsub.s32 %v495, 2
  %vm497 = vcmp.gt.s32.totalorder 0, %v496
  %v498 = vsel %vm497, 0, %v496
  %v499 = vsub.s32 32, %v498
  %v500 = vshll.u32 %v491, %v498
  %v501 = vshrl.u32 %v483, %v499
  %v502 = vor.u32 %v500, %v501
  %v503 = vsub.s32 4294967266, %v498
  %v504 = vadd.s32 %v503, 127
  %v505 = vshll.u32 %v504, 23
  %v506 = vor.u32 4788187, %v505
  %v507 = vand.u32 2147483647, %v506
  %v509 = vcvt.s32.f32 %v502
  %v510 = vmul.f32 %v509, %v507
  %v511 = vxor.u32 %v510, 2147483648
  %v512 = vsel %vm429, %v511, %v510
  %v513 = vsub.s32 4, %v489
  %v514 = vsel %vm429, %v513, %v489
  %v515 = vsel %vm428, %v112, %v512
  %v516 = vsel %vm428, 0, %v514
  %v517 = vcosq.f32.pop %v515
  %v518 = vsinq.f32.pop %v515
  %vm519 = vweird.f32 %v112
  %v520 = vadd.s32 %v516, 3
  %v521 = vand.u32 %v520, 3
  %vm522 = vcmp.lt.s32.totalorder %v521, 2
  %vm523 = vcmp.eq.s32.totalorder %v521, 0
  %v524 = vxor.u32 %v518, 2147483648
  %v525 = vsel %vm523, %v517, %v524
  %vm526 = vcmp.eq.s32.totalorder %v521, 2
  %v527 = vxor.u32 %v517, 2147483648
  %v528 = vsel %vm526, %v527, %v518
  %v529 = vsel %vm522, %v525, %v528
  %v530 = vsel %vm519, nan, %v529
  %531 = vst [vmem:[%s2] sm:$0xff] %v218
  %532 = vst [vmem:[%s2 + $0x8] sm:$0xff] %v322
  %533 = vst [vmem:[%s2 + $0x10] sm:$0xff] %v426
  %534 = vst [vmem:[%s2 + $0x18] sm:$0xff] %v530
  // Predicated region
  $region10: #{positional_encoding.1} parent=0 // pred_check
    _
  $region11: #{positional_encoding.1} parent=0 // pred_check_branch
    %536 = sbr.rel (0) target = $region13
  $region12: #{positional_encoding.1} parent=0 // pred_region
    _
  $region13: #{positional_encoding.1} parent=0 // pred_fallthru
    _
  // Predicated region
  $region14: #{positional_encoding.1} parent=0 // pred_check
    _
  $region15: #{positional_encoding.1} parent=0 // pred_check_branch
    %538 = sbr.rel (0) target = $region17
  $region16: #{positional_encoding.1} parent=0 // pred_region
    _
  $region17: #{positional_encoding.1} parent=0 // pred_fallthru
    _

</llo_original>
